<compile_context>
chip_gen: v7x
topology: tpu7x:2x2x1
jax: 0.10.0
libtpu: 0.0.40
codegen_flags: <defaults>
</compile_context>

<pallas_src>
import math
from functools import partial

import jax
import jax.numpy as jnp
from jax import lax
from jax.experimental import pallas as pl
from jax.experimental.pallas import tpu as pltpu

NUM_LANES = 128
_VMEM_BUDGET = 32 * 1024 * 1024   # conservative tile budget, fits v7x's 64 MiB


def _sublane(dtype):
    return {4: 8, 2: 16, 1: 32}.get(jnp.dtype(dtype).itemsize, 8)


def _pick_tile(n, target, sublane=8):
    """Largest divisor of n that is <= target, preferring 256/128 multiples."""
    if n <= target:
        return n
    for pref in (256, 128, sublane):
        t = (target // pref) * pref
        while t >= pref:
            if n % t == 0:
                return t
            t -= pref
    return n


# --------------------------- k/v projection pass -----------------------------

def _kv_proj_kernel(x_ref, wk_ref, wv_ref, k_ref, v_ref, *, compute_dtype):
    x = x_ref[...].astype(compute_dtype)             # (tm, dim_in)
    dn = (((1,), (1,)), ((), ()))                    # contract shared last dim
    k = lax.dot_general(x, wk_ref[...].astype(compute_dtype), dn,
                        preferred_element_type=jnp.float32)
    v = lax.dot_general(x, wv_ref[...].astype(compute_dtype), dn,
                        preferred_element_type=jnp.float32)
    k_ref[...] = k.astype(k_ref.dtype)
    v_ref[...] = v.astype(v_ref.dtype)


def _kv_projection(x, w_k, w_v, tm, compute_dtype, vmem_limit):
    batch, n, dim_in = x.shape
    dim_k = w_k.shape[0]
    dim_v = w_v.shape[0]
    return pl.pallas_call(
        partial(_kv_proj_kernel, compute_dtype=compute_dtype),
        grid_spec=pltpu.PrefetchScalarGridSpec(
            num_scalar_prefetch=0,
            grid=(batch, n // tm),
            in_specs=[
                pl.BlockSpec((None, tm, dim_in), lambda b, i: (b, i, 0)),
                pl.BlockSpec((dim_k, dim_in), lambda b, i: (0, 0)),
                pl.BlockSpec((dim_v, dim_in), lambda b, i: (0, 0)),
            ],
            out_specs=[
                pl.BlockSpec((None, tm, dim_k), lambda b, i: (b, i, 0)),
                pl.BlockSpec((None, tm, dim_v), lambda b, i: (b, i, 0)),
            ],
        ),
        out_shape=(
            jax.ShapeDtypeStruct((batch, n, dim_k), x.dtype),   # k cache
            jax.ShapeDtypeStruct((batch, n, dim_v), x.dtype),   # v cache
        ),
        compiler_params=pltpu.CompilerParams(
            dimension_semantics=("parallel", "parallel"),
            vmem_limit_bytes=vmem_limit,
        ),
    )(x, w_k, w_v)


# -------------------- flash-attention pass (q fused in) ----------------------

def _flash_attn_kernel(x_ref, wq_ref, k_ref, v_ref, o_ref,
                       q_sc, m_sc, l_sc, acc_sc, *, norm_fact, compute_dtype):
    ki = pl.program_id(2)

    @pl.when(ki == 0)
    def _():
        # Fused q projection: q = (x @ Wq.T) * 1/sqrt(dim_k), computed once per
        # (batch, q-tile) and kept in VMEM scratch — no HBM round trip for q.
        dn = (((1,), (1,)), ((), ()))
        q = lax.dot_general(x_ref[...].astype(compute_dtype),
                            wq_ref[...].astype(compute_dtype), dn,
                            preferred_element_type=jnp.float32)
        q_sc[...] = (q * norm_fact).astype(compute_dtype)
        m_sc[...] = jnp.full_like(m_sc, -jnp.inf)
        l_sc[...] = jnp.zeros_like(l_sc)
        acc_sc[...] = jnp.zeros_like(acc_sc)

    q = q_sc[...]                                    # (tq, dim_k), pre-scaled
    k = k_ref[...].astype(compute_dtype)             # (tk, dim_k)
    v = v_ref[...].astype(compute_dtype)             # (tk, dim_v)

    # scores = q @ k.T as a contraction over the shared last dim (no transpose).
    s = lax.dot_general(q, k, (((1,), (1,)), ((), ())),
                        preferred_element_type=jnp.float32)       # (tq, tk)

    m_prev = m_sc[...]                               # (tq, 128) lane-replicated
    m_new = jnp.maximum(m_prev, jnp.max(s, axis=-1, keepdims=True))
    alpha = jnp.exp(m_prev - m_new)                  # (tq, 128)
    p = jnp.exp(s - m_new[:, 0:1])                   # (tq, tk)
    l_sc[...] = alpha * l_sc[...] + jnp.sum(p, axis=-1, keepdims=True)
    acc_sc[...] = alpha[:, 0:1] * acc_sc[...] + lax.dot_general(
        p.astype(compute_dtype), v, (((1,), (0,)), ((), ())),
        preferred_element_type=jnp.float32)
    m_sc[...] = m_new

    @pl.when(ki == pl.num_programs(2) - 1)
    def _():
        inv_l = pl.reciprocal(l_sc[:, 0:1], approx=True)          # EUP slot
        o_ref[...] = (acc_sc[...] * inv_l).astype(o_ref.dtype)


def _flash_attention(x, w_q, k, v, norm_fact, tq, tk, compute_dtype, vmem_limit):
    batch, n, dim_in = x.shape
    dim_k = w_q.shape[0]
    dim_v = v.shape[-1]
    nk = k.shape[1]

    return pl.pallas_call(
        partial(_flash_attn_kernel, norm_fact=norm_fact,
                compute_dtype=compute_dtype),
        grid_spec=pltpu.PrefetchScalarGridSpec(
            num_scalar_prefetch=0,
            grid=(batch, n // tq, nk // tk),          # kv (reduction) axis last
            in_specs=[
                pl.BlockSpec((None, tq, dim_in), lambda b, qi, ki: (b, qi, 0)),
                pl.BlockSpec((dim_k, dim_in), lambda b, qi, ki: (0, 0)),
                pl.BlockSpec((None, tk, dim_k), lambda b, qi, ki: (b, ki, 0)),
                pl.BlockSpec((None, tk, dim_v), lambda b, qi, ki: (b, ki, 0)),
            ],
            out_specs=pl.BlockSpec((None, tq, dim_v),
                                   lambda b, qi, ki: (b, qi, 0)),
            scratch_shapes=[
                pltpu.VMEM((tq, dim_k), compute_dtype),       # fused q tile
                pltpu.VMEM((tq, NUM_LANES), jnp.float32),     # running max m
                pltpu.VMEM((tq, NUM_LANES), jnp.float32),     # running denom l
                pltpu.VMEM((tq, dim_v), jnp.float32),         # output accum
            ],
        ),
        out_shape=jax.ShapeDtypeStruct((batch, n, dim_v), x.dtype),
        compiler_params=pltpu.CompilerParams(
            dimension_semantics=("parallel", "parallel", "arbitrary"),
            vmem_limit_bytes=vmem_limit,
        ),
    )(x, w_q, k, v)


# -------------------------------- wrapper ------------------------------------

def self_attention(x, w_q, w_k, w_v, *, q_tile=512, kv_tile=1024,
                   proj_tile=512, prefer_bf16_mxu=True):
    """x: (batch, n, dim_in); w_*: (out_features, in_features) PyTorch layout.

    Returns (att, k_cache, v_cache) matching SelfAttention.forward(x).
    """
    batch, n, dim_in = x.shape
    dim_k = w_q.shape[0]
    dim_v = w_v.shape[0]
    norm_fact = 1.0 / math.sqrt(dim_k)

    in_bytes = jnp.dtype(x.dtype).itemsize
    sub = _sublane(x.dtype)
    compute_dtype = jnp.bfloat16 if prefer_bf16_mxu else x.dtype
    cbytes = jnp.dtype(compute_dtype).itemsize

    tm = _pick_tile(n, proj_tile, sub)
    tq = _pick_tile(n, q_tile, sub)
    tk = _pick_tile(n, kv_tile, sub)

    # Keep >= 2 parallel grid slices so both TensorCores get work (v7x) even
    # when batch == 1.
    if batch * (n // tq) < 2:
        tq_half = _pick_tile(n, max(n // 2, sub), sub)
        if tq_half < tq:
            tq = tq_half
    if batch * (n // tm) < 2:
        tm_half = _pick_tile(n, max(n // 2, sub), sub)
        if tm_half < tm:
            tm = tm_half

    # Double-buffered VMEM footprint of the flash pass (inputs + output + scratch).
    def flash_fp(tq_, tk_):
        buf = 2 * (tq_ * dim_in + dim_k * dim_in + tk_ * dim_k + tk_ * dim_v
                   + tq_ * dim_v) * in_bytes
        scr = (tq_ * dim_k * cbytes + 2 * tq_ * NUM_LANES * 4
               + tq_ * dim_v * 4)
        return buf + scr

    while flash_fp(tq, tk) > _VMEM_BUDGET:
        if tk >= tq:
            nt = _pick_tile(n, max(tk // 2, sub), sub)
            if nt >= tk:
                break
            tk = nt
        else:
            nt = _pick_tile(n, max(tq // 2, sub), sub)
            if nt >= tq:
                break
            tq = nt

    def proj_fp(tm_):
        return 2 * (tm_ * dim_in + (dim_k + dim_v) * dim_in
                    + tm_ * dim_k + tm_ * dim_v) * in_bytes

    while proj_fp(tm) > _VMEM_BUDGET:
        nt = _pick_tile(n, max(tm // 2, sub), sub)
        if nt >= tm:
            break
        tm = nt

    footprint = max(flash_fp(tq, tk), proj_fp(tm))
    vmem_limit = int(min(48 * 1024 * 1024,
                         max(32 * 1024 * 1024, footprint + (8 << 20))))

    k, v = _kv_projection(x, w_k, w_v, tm, compute_dtype, vmem_limit)
    att = _flash_attention(x, w_q, k, v, norm_fact, tq, tk,
                           compute_dtype, vmem_limit)
    return att, k, v


# ------------------------------- reference -----------------------------------

def _reference(x, w_q, w_k, w_v):
    hp = jax.lax.Precision.HIGHEST
    q = jnp.einsum("bni,ki->bnk", x, w_q, precision=hp)
    k = jnp.einsum("bni,ki->bnk", x, w_k, precision=hp)
    v = jnp.einsum("bni,vi->bnv", x, w_v, precision=hp)
    dist = jnp.einsum("bnk,bmk->bnm", q, k, precision=hp) / math.sqrt(w_q.shape[0])
    dist = jax.nn.softmax(dist, axis=-1)
    att = jnp.einsum("bnm,bmv->bnv", dist, v, precision=hp)
    return att, k, v


if __name__ == "__main__":
    batch, n, dim_in, dim_k, dim_v = 2, 512, 128, 128, 128

    key = jax.random.PRNGKey(0)
    kx, kq, kk, kv = jax.random.split(key, 4)
    x = jax.random.normal(kx, (batch, n, dim_in), dtype=jnp.float32)
    # Deterministic "Linear" weights (PyTorch layout: (out_features, in_features))
    bound = 1.0 / math.sqrt(dim_in)
    w_q = jax.random.uniform(kq, (dim_k, dim_in), jnp.float32, -bound, bound)
    w_k = jax.random.uniform(kk, (dim_k, dim_in), jnp.float32, -bound, bound)
    w_v = jax.random.uniform(kv, (dim_v, dim_in), jnp.float32, -bound, bound)

    att_ref, k_ref, v_ref = _reference(x, w_q, w_k, w_v)

    # 1) Performance default: large tiles + bf16 MXU operands (f32 accumulate).
    att, k_cache, v_cache = self_attention(x, w_q, w_k, w_v)
    jax.block_until_ready((att, k_cache, v_cache))
    assert jnp.allclose(k_cache, k_ref, atol=2e-2, rtol=2e-2)
    assert jnp.allclose(v_cache, v_ref, atol=2e-2, rtol=2e-2)
    assert jnp.allclose(att, att_ref, atol=2e-2, rtol=2e-2)

    # 2) Exact-f32 MXU path with small tiles: exercises the multi-step
    #    online-softmax accumulation across kv blocks at tight tolerance.
    att2, k2, v2 = self_attention(x, w_q, w_k, w_v, q_tile=128, kv_tile=128,
                                  proj_tile=128, prefer_bf16_mxu=False)
    jax.block_until_ready((att2, k2, v2))
    assert jnp.allclose(k2, k_ref, atol=2e-3, rtol=2e-3)
    assert jnp.allclose(v2, v_ref, atol=2e-3, rtol=2e-3)
    assert jnp.allclose(att2, att_ref, atol=2e-3, rtol=2e-3)

    print("KERNEL_OK")
</pallas_src>

<mosaic_0001>
module attributes {stable_mosaic.version = 11 : i64} {
  func.func @_kv_proj_kernel(%arg0: i32, %arg1: i32, %arg2: memref<1x512x128xf32, #tpu.memory_space<vmem>>, %arg3: memref<128x128xf32, #tpu.memory_space<vmem>>, %arg4: memref<128x128xf32, #tpu.memory_space<vmem>>, %arg5: memref<1x512x128xf32, #tpu.memory_space<vmem>>, %arg6: memref<1x512x128xf32, #tpu.memory_space<vmem>>) attributes {dimension_semantics = [#tpu.dimension_semantics<parallel>, #tpu.dimension_semantics<parallel>], iteration_bounds = array<i64: 2, 1>, scalar_prefetch = 0 : i64, scratch_operands = 0 : i64, tpu.core_type = #tpu.core_type<tc>, window_params = [{transform_indices = @transform_0, window_bounds = array<i64: 1, 512, 128>}, {pipeline_mode = #tpu.pipeline_mode<synchronous>, transform_indices = @transform_1, window_bounds = array<i64: 128, 128>}, {pipeline_mode = #tpu.pipeline_mode<synchronous>, transform_indices = @transform_2, window_bounds = array<i64: 128, 128>}, {transform_indices = @transform_3, window_bounds = array<i64: 1, 512, 128>}, {transform_indices = @transform_4, window_bounds = array<i64: 1, 512, 128>}]} {
    %c0 = arith.constant 0 : index
    %c0_0 = arith.constant 0 : index
    %c0_1 = arith.constant 0 : index
    %0 = vector.load %arg2[%c0, %c0_0, %c0_1] : memref<1x512x128xf32, #tpu.memory_space<vmem>>, vector<1x512x128xf32>
    %1 = vector.shape_cast %0 : vector<1x512x128xf32> to vector<512x128xf32>
    %2 = arith.truncf %1 : vector<512x128xf32> to vector<512x128xbf16>
    %c0_2 = arith.constant 0 : index
    %c0_3 = arith.constant 0 : index
    %3 = vector.load %arg3[%c0_2, %c0_3] : memref<128x128xf32, #tpu.memory_space<vmem>>, vector<128x128xf32>
    %4 = arith.truncf %3 : vector<128x128xf32> to vector<128x128xbf16>
    %cst = arith.constant dense<0.000000e+00> : vector<512x128xf32>
    %5 = tpu.matmul %2, %4, %cst {dimension_numbers = #tpu.dot_dimension_numbers<[1], [1], [0], [0], [0, 0, 1, 0], [], []>} : vector<512x128xbf16>, vector<128x128xbf16>, vector<512x128xf32> -> vector<512x128xf32>
    %c0_4 = arith.constant 0 : index
    %c0_5 = arith.constant 0 : index
    %6 = vector.load %arg4[%c0_4, %c0_5] : memref<128x128xf32, #tpu.memory_space<vmem>>, vector<128x128xf32>
    %7 = arith.truncf %6 : vector<128x128xf32> to vector<128x128xbf16>
    %cst_6 = arith.constant dense<0.000000e+00> : vector<512x128xf32>
    %8 = tpu.matmul %2, %7, %cst_6 {dimension_numbers = #tpu.dot_dimension_numbers<[1], [1], [0], [0], [0, 0, 1, 0], [], []>} : vector<512x128xbf16>, vector<128x128xbf16>, vector<512x128xf32> -> vector<512x128xf32>
    %c0_7 = arith.constant 0 : index
    %c0_8 = arith.constant 0 : index
    %c0_9 = arith.constant 0 : index
    %9 = vector.load %arg5[%c0_7, %c0_8, %c0_9] : memref<1x512x128xf32, #tpu.memory_space<vmem>>, vector<1x512x128xf32>
    %10 = vector.shape_cast %9 : vector<1x512x128xf32> to vector<512x128xf32>
    %11 = vector.shape_cast %5 : vector<512x128xf32> to vector<1x512x128xf32>
    tpu.vector_store %arg5[%c0_7, %c0_8, %c0_9], %11 {strides = array<i32>} : memref<1x512x128xf32, #tpu.memory_space<vmem>>, vector<1x512x128xf32>,
    %c0_10 = arith.constant 0 : index
    %c0_11 = arith.constant 0 : index
    %c0_12 = arith.constant 0 : index
    %12 = vector.load %arg6[%c0_10, %c0_11, %c0_12] : memref<1x512x128xf32, #tpu.memory_space<vmem>>, vector<1x512x128xf32>
    %13 = vector.shape_cast %12 : vector<1x512x128xf32> to vector<512x128xf32>
    %14 = vector.shape_cast %8 : vector<512x128xf32> to vector<1x512x128xf32>
    tpu.vector_store %arg6[%c0_10, %c0_11, %c0_12], %14 {strides = array<i32>} : memref<1x512x128xf32, #tpu.memory_space<vmem>>, vector<1x512x128xf32>,
    return
  }
  func.func @transform_0(%arg0: i32, %arg1: i32) -> (i32, i32, i32) {
    %c0_i32 = arith.constant 0 : i32
    %c0_i32_0 = arith.constant 0 : i32
    return %arg0, %arg1, %c0_i32 : i32, i32, i32
  }
  func.func @transform_1(%arg0: i32, %arg1: i32) -> (i32, i32) {
    %c0_i32 = arith.constant 0 : i32
    %c0_i32_0 = arith.constant 0 : i32
    %c0_i32_1 = arith.constant 0 : i32
    return %c0_i32, %c0_i32_0 : i32, i32
  }
  func.func @transform_2(%arg0: i32, %arg1: i32) -> (i32, i32) {
    %c0_i32 = arith.constant 0 : i32
    %c0_i32_0 = arith.constant 0 : i32
    %c0_i32_1 = arith.constant 0 : i32
    return %c0_i32, %c0_i32_0 : i32, i32
  }
  func.func @transform_3(%arg0: i32, %arg1: i32) -> (i32, i32, i32) {
    %c0_i32 = arith.constant 0 : i32
    %c0_i32_0 = arith.constant 0 : i32
    return %arg0, %arg1, %c0_i32 : i32, i32, i32
  }
  func.func @transform_4(%arg0: i32, %arg1: i32) -> (i32, i32, i32) {
    %c0_i32 = arith.constant 0 : i32
    %c0_i32_0 = arith.constant 0 : i32
    return %arg0, %arg1, %c0_i32 : i32, i32, i32
  }
}

</mosaic_0001>

<llo_original>
// kernel: tpu_custom_call.1
$region0: #{tpu_custom_call.1}
  #allocation0 [shape = 'u32[]', space=smem, size = 0x4, offset = 0x4, fixed_abs, tag = 'smem constant byte address 0x4 - core index']
  #allocation1 [shape = 'u32[144,128]{1,0:T(1,128)}', space=vmem, size = 0x12000, scoped, tag = 'internal scratch']
  %s0 = inlined_call_operand.hbm [shape: f32[2,512,128], index: 0, kind: input, shape index: {}]
  %s1 = inlined_call_operand.hbm [shape: f32[128,128], index: 1, kind: input, shape index: {}]
  %s2 = inlined_call_operand.hbm [shape: f32[128,128], index: 2, kind: input, shape index: {}]
  %s3 = inlined_call_operand.hbm [shape: f32[2,512,128], index: 3, kind: output, shape index: {0}]
  %s4 = inlined_call_operand.hbm [shape: f32[2,512,128], index: 4, kind: output, shape index: {1}]
  %5 = xla_tuple %s3, %s4
  %s6 = sld [smem:[#allocation0]]
  $region65: #{tpu_custom_call.1} parent=0
    _
  %s8 = ssub.s32 1, %s6
  %s9 = scalar_select 0, %s8, %s6
  $region1: #{tpu_custom_call.1} parent=0
    #allocation2 [shape = 'u8[524288]{0}', space=vmem, size = 0x80000, scoped, tag = 'input window, operand 0']
    #allocation3 [shape = 's32[2]{0}', space=sflag, size = 0x8, scoped, tag = 'scoped memory for tpu_custom_call.1']
    #allocation4 [shape = 's32[2]{0}', space=sflag, size = 0x8, scoped, tag = 'scoped memory for tpu_custom_call.1']
    #allocation5 [shape = 'u8[65536]{0}', space=vmem, size = 0x10000, scoped, tag = 'input window, operand 1, single buffered']
    #allocation6 [shape = 's32[1]{0}', space=sflag, size = 0x4, scoped, tag = 'scoped memory for tpu_custom_call.1']
    #allocation7 [shape = 'u8[65536]{0}', space=vmem, size = 0x10000, scoped, tag = 'input window, operand 2, single buffered']
    #allocation8 [shape = 'u8[524288]{0}', space=vmem, size = 0x80000, scoped, tag = 'output window, operand 0']
    #allocation9 [shape = 'u8[524288]{0}', space=vmem, size = 0x80000, scoped, tag = 'output window, operand 1']
    #allocation10 [shape = 's32[2]{0}', space=sflag, size = 0x8, scoped, tag = 'scoped memory for tpu_custom_call.1']
    %10 = vsyncpa [#allocation3], 0
    %s11 = scalar_lea.sflag [#allocation3], 1
    %12 = vsyncpa %s11, 0
    %13 = vsyncpa [#allocation6], 0
    %14 = vsyncpa [#allocation4], 0
    %s15 = scalar_lea.sflag [#allocation4], 1
    %16 = vsyncpa %s15, 0
    %17 = vsyncpa [#allocation10], 0
    %s18 = scalar_lea.sflag [#allocation10], 1
    %19 = vsyncpa %s18, 0
    loop: start=0, step=1, limit=4
    $region2: #{tpu_custom_call.1} parent=1 // loop_pre_header
      _
    $region3: #{tpu_custom_call.1} parent=1 // loop_header
      %s21 = sphi 0, %s25
      %p22 = scmp.ge.s32.totalorder %s21, 4
      %s28 = sphi 0, %s40
      %s29 = sphi 0, %s36
      %s30 = sphi 0, %s28
      %s31 = sphi 0, %s29
      %s32 = sphi 0, %s30
      %s33 = sphi 0, %s31
      %s45 = sphi 0, %s47
      %s48 = sphi 0, %s45
      %s49 = sphi 0, %s48
      %s65 = sphi 0, %s49
      %s69 = sphi 0, %s69
      %s71 = sphi 0, %s69
      %s72 = sphi 0, %s71
      %s86 = sphi 0, %s72
      %s90 = sphi 0, %s90
      %s92 = sphi 0, %s90
      %s93 = sphi 0, %s92
      %s107 = sphi 0, %s93
      %s115 = sphi 0, %s117
      %s118 = sphi 0, %s115
      %s119 = sphi 0, %s118
      %s135 = sphi 0, %s119
      %s143 = sphi 0, %s145
      %s146 = sphi 0, %s143
      %s147 = sphi 0, %s146
      %s163 = sphi 0, %s147
    $region4: #{tpu_custom_call.1} parent=1 // loop_header_branch
      %24 = sbr.rel (%p22) target = $region8
    $region5: #{tpu_custom_call.1} parent=1 // loop_body
      %s26 = ssub.s32 %s21, 1
      %s27 = ssub.s32 %s21, 2
      %s34 = sadd.s32 1, %s29
      %p35 = scmp.ge.s32.totalorder %s34, 1
      %s36 = scalar_select %p35, 0, %s34
      %s37 = sadd.s32 1, %s28
      %s38 = scalar_select %p35, %s37, %s28
      %p39 = scmp.ge.s32.totalorder %s38, 2
      %s40 = scalar_select %p39, 0, %s38
      %s41 = ssub.s32 %s28, %s40
      %s42 = ssub.s32 %s29, %s36
      %s43 = sor.u32 %s41, %s42
      %p44 = scmp.eq.s32.totalorder %s43, 0
      %s46 = sadd.s32 %s45, 1
      %s47 = scalar_select %p44, %s45, %s46
      %p50 = pneg %p44
      %p51 = scmp.eq.s32.totalorder %s21, 1
      %p52 = por %p50, %p51
      %p53 = scmp.ne.s32.totalorder %s45, %s48
      %p54 = scmp.eq.s32.totalorder %s21, 0
      %p55 = por %p53, %p54
      %p56 = scmp.ne.s32.totalorder %s45, %s48
      %p57 = scmp.eq.s32.totalorder %s26, 1
      %p58 = por %p56, %p57
      %p59 = scmp.ne.s32.totalorder %s48, %s49
      %p60 = scmp.eq.s32.totalorder %s26, 0
      %p61 = por %p59, %p60
      %p62 = scmp.ne.s32.totalorder %s48, %s49
      %p63 = scmp.eq.s32.totalorder %s27, 1
      %p64 = por %p62, %p63
      %p66 = scmp.ne.s32.totalorder %s49, %s65
      %p67 = scmp.eq.s32.totalorder %s27, 0
      %p68 = por %p66, %p67
      %s70 = sadd.s32 %s69, 1
      %p73 = scmp.eq.s32.totalorder %s21, 1
      %p74 = scmp.ne.s32.totalorder %s69, %s71
      %p75 = scmp.eq.s32.totalorder %s21, 0
      %p76 = por %p74, %p75
      %p77 = scmp.ne.s32.totalorder %s69, %s71
      %p78 = scmp.eq.s32.totalorder %s26, 1
      %p79 = por %p77, %p78
      %p80 = scmp.ne.s32.totalorder %s71, %s72
      %p81 = scmp.eq.s32.totalorder %s26, 0
      %p82 = por %p80, %p81
      %p83 = scmp.ne.s32.totalorder %s71, %s72
      %p84 = scmp.eq.s32.totalorder %s27, 1
      %p85 = por %p83, %p84
      %p87 = scmp.ne.s32.totalorder %s72, %s86
      %p88 = scmp.eq.s32.totalorder %s27, 0
      %p89 = por %p87, %p88
      %s91 = sadd.s32 %s90, 1
      %p94 = scmp.eq.s32.totalorder %s21, 1
      %p95 = scmp.ne.s32.totalorder %s90, %s92
      %p96 = scmp.eq.s32.totalorder %s21, 0
      %p97 = por %p95, %p96
      %p98 = scmp.ne.s32.totalorder %s90, %s92
      %p99 = scmp.eq.s32.totalorder %s26, 1
      %p100 = por %p98, %p99
      %p101 = scmp.ne.s32.totalorder %s92, %s93
      %p102 = scmp.eq.s32.totalorder %s26, 0
      %p103 = por %p101, %p102
      %p104 = scmp.ne.s32.totalorder %s92, %s93
      %p105 = scmp.eq.s32.totalorder %s27, 1
      %p106 = por %p104, %p105
      %p108 = scmp.ne.s32.totalorder %s93, %s107
      %p109 = scmp.eq.s32.totalorder %s27, 0
      %p110 = por %p108, %p109
      %s111 = ssub.s32 %s28, %s40
      %s112 = ssub.s32 %s29, %s36
      %s113 = sor.u32 %s111, %s112
      %p114 = scmp.eq.s32.totalorder %s113, 0
      %s116 = sadd.s32 %s115, 1
      %s117 = scalar_select %p114, %s115, %s116
      %p120 = pneg %p114
      %p121 = scmp.eq.s32.totalorder %s21, 1
      %p122 = por %p120, %p121
      %p123 = scmp.ne.s32.totalorder %s115, %s118
      %p124 = scmp.eq.s32.totalorder %s21, 0
      %p125 = por %p123, %p124
      %p126 = scmp.ne.s32.totalorder %s115, %s118
      %p127 = scmp.eq.s32.totalorder %s26, 1
      %p128 = por %p126, %p127
      %p129 = scmp.ne.s32.totalorder %s118, %s119
      %p130 = scmp.eq.s32.totalorder %s26, 0
      %p131 = por %p129, %p130
      %p132 = scmp.ne.s32.totalorder %s118, %s119
      %p133 = scmp.eq.s32.totalorder %s27, 1
      %p134 = por %p132, %p133
      %p136 = scmp.ne.s32.totalorder %s119, %s135
      %p137 = scmp.eq.s32.totalorder %s27, 0
      %p138 = por %p136, %p137
      %s139 = ssub.s32 %s28, %s40
      %s140 = ssub.s32 %s29, %s36
      %s141 = sor.u32 %s139, %s140
      %p142 = scmp.eq.s32.totalorder %s141, 0
      %s144 = sadd.s32 %s143, 1
      %s145 = scalar_select %p142, %s143, %s144
      %p148 = pneg %p142
      %p149 = scmp.eq.s32.totalorder %s21, 1
      %p150 = por %p148, %p149
      %p151 = scmp.ne.s32.totalorder %s143, %s146
      %p152 = scmp.eq.s32.totalorder %s21, 0
      %p153 = por %p151, %p152
      %p154 = scmp.ne.s32.totalorder %s143, %s146
      %p155 = scmp.eq.s32.totalorder %s26, 1
      %p156 = por %p154, %p155
      %p157 = scmp.ne.s32.totalorder %s146, %s147
      %p158 = scmp.eq.s32.totalorder %s26, 0
      %p159 = por %p157, %p158
      %p160 = scmp.ne.s32.totalorder %s146, %s147
      %p161 = scmp.eq.s32.totalorder %s27, 1
      %p162 = por %p160, %p161
      %p164 = scmp.ne.s32.totalorder %s147, %s163
      %p165 = scmp.eq.s32.totalorder %s27, 0
      %p166 = por %p164, %p165
      %p167 = scmp.le.s32.totalorder 1, %s21
      %p168 = scmp.lt.s32.totalorder %s21, 3
      %p169 = pnand %p167, %p168
      %p170 = pneg %p169
      // Predicated region
      $region9: #{tpu_custom_call.1} parent=5 // pred_check
        _
      $region10: #{tpu_custom_call.1} parent=5 // pred_check_branch
        %172 = sbr.rel (%p169) target = $region12
      $region11: #{tpu_custom_call.1} parent=5 // pred_region
        %s173 = ssub.s32 %s21, 1
        // Predicated region
        $region13: #{tpu_custom_call.1} parent=11 // pred_check
          %p174 = pneg %p82
        $region14: #{tpu_custom_call.1} parent=11 // pred_check_branch
          %176 = sbr.rel (%p174) target = $region16
        $region15: #{tpu_custom_call.1} parent=11 // pred_region
          %s178 = ssub.s32 2048, 2048
          %179 = vsyncadd [#allocation6], %s178
          %s180 = sshll.u32 [#allocation5], 4
          %s181 = int_to_ptr.vmem [resolvable:$true] %s180
          %186 = dma.hbm_to_vmem [thread:$0]  %s1, 2048, %s181, [#allocation6], 128, 128, 8
        $region16: #{tpu_custom_call.1} parent=11 // pred_fallthru
          _
        // Predicated region
        $region17: #{tpu_custom_call.1} parent=11 // pred_check
          %p187 = pneg %p103
        $region18: #{tpu_custom_call.1} parent=11 // pred_check_branch
          %189 = sbr.rel (%p187) target = $region20
        $region19: #{tpu_custom_call.1} parent=11 // pred_region
          %s191 = ssub.s32 2048, 2048
          %192 = vsyncadd [#allocation6], %s191
          %s193 = sshll.u32 [#allocation7], 4
          %s194 = int_to_ptr.vmem [resolvable:$true] %s193
          %199 = dma.hbm_to_vmem [thread:$0]  %s2, 2048, %s194, [#allocation6], 128, 128, 8
        $region20: #{tpu_custom_call.1} parent=11 // pred_fallthru
          _
      $region12: #{tpu_custom_call.1} parent=5 // pred_fallthru
        _
      %p200 = scmp.lt.s32.totalorder %s21, 2
      // Predicated region
      $region21: #{tpu_custom_call.1} parent=5 // pred_check
        %p201 = pneg %p200
      $region22: #{tpu_custom_call.1} parent=5 // pred_check_branch
        %203 = sbr.rel (%p201) target = $region24
      $region23: #{tpu_custom_call.1} parent=5 // pred_region
        // Predicated region
        $region25: #{tpu_custom_call.1} parent=23 // pred_check
          %p204 = pneg %p55
        $region26: #{tpu_custom_call.1} parent=23 // pred_check_branch
          %206 = sbr.rel (%p204) target = $region28
        $region27: #{tpu_custom_call.1} parent=23 // pred_region
          %s207 = sand.u32 %s45, 1
          %s208 = scalar_lea.sflag [#allocation3], %s207
          %s209 = sand.u32 %s45, 1
          %s210 = smul.addr %s209, 512
          %s211 = scalar_lea.vmem [#allocation2], %s210
          %s212 = smul.u32 64, %s29
          %s214 = ssub.s32 8192, 8192
          %215 = vsyncadd %s208, %s214
          %s216 = smul.addr %s28, 64
          %s217 = sadd.s32 %s212, %s216
          %s218 = smul.addr %s217, 128
          %s219 = scalar_lea.hbm %s0, %s218
          %s220 = sshll.u32 %s211, 4
          %s221 = int_to_ptr.vmem [resolvable:$true] %s220
          %226 = dma.hbm_to_vmem [thread:$0]  %s219, 8192, %s221, %s208, 128, 128, 8
        $region28: #{tpu_custom_call.1} parent=23 // pred_fallthru
          _
      $region24: #{tpu_custom_call.1} parent=5 // pred_fallthru
        _
      %p227 = scmp.le.s32.totalorder 1, %s21
      %p228 = scmp.lt.s32.totalorder %s21, 3
      %p229 = pnand %p227, %p228
      %p230 = pneg %p229
      // Predicated region
      $region29: #{tpu_custom_call.1} parent=5 // pred_check
        _
      $region30: #{tpu_custom_call.1} parent=5 // pred_check_branch
        %232 = sbr.rel (%p229) target = $region32
      $region31: #{tpu_custom_call.1} parent=5 // pred_region
        %s233 = ssub.s32 %s21, 1
        %s234 = sand.u32 %s48, 1
        %s235 = scalar_lea.sflag [#allocation3], %s234
        %s236 = sand.u32 %s48, 1
        %s237 = smul.addr %s236, 512
        %s238 = scalar_lea.vmem [#allocation2], %s237
        // Predicated region
        $region33: #{tpu_custom_call.1} parent=31 // pred_check
          %p239 = pneg %p61
        $region34: #{tpu_custom_call.1} parent=31 // pred_check_branch
          %241 = sbr.rel (%p239) target = $region36
        $region35: #{tpu_custom_call.1} parent=31 // pred_region
          %242 = dma.done %s235, 8192
        $region36: #{tpu_custom_call.1} parent=31 // pred_fallthru
          _
        // Predicated region
        $region37: #{tpu_custom_call.1} parent=31 // pred_check
          %p243 = pneg %p82
        $region38: #{tpu_custom_call.1} parent=31 // pred_check_branch
          %245 = sbr.rel (%p243) target = $region40
        $region39: #{tpu_custom_call.1} parent=31 // pred_region
          %246 = dma.done [#allocation6], 2048
        $region40: #{tpu_custom_call.1} parent=31 // pred_fallthru
          _
        // Predicated region
        $region41: #{tpu_custom_call.1} parent=31 // pred_check
          %p247 = pneg %p103
        $region42: #{tpu_custom_call.1} parent=31 // pred_check_branch
          %249 = sbr.rel (%p247) target = $region44
        $region43: #{tpu_custom_call.1} parent=31 // pred_region
          %250 = dma.done [#allocation6], 2048
        $region44: #{tpu_custom_call.1} parent=31 // pred_fallthru
          _
        %s251 = sand.u32 %s48, 1
        %s252 = scalar_lea.sflag [#allocation3], %s251
        %s253 = sand.u32 %s48, 1
        %s254 = smul.addr %s253, 512
        %s255 = scalar_lea.vmem [#allocation2], %s254
        %p256 = pneg %p61
        %p257 = pneg %p58
        %p258 = pneg %p82
        %p259 = pneg %p79
        %p260 = pneg %p103
        %p261 = pneg %p100
        %p262 = pneg %p131
        %p263 = pneg %p128
        %s264 = sand.u32 %s118, 1
        %s265 = scalar_lea.sflag [#allocation4], %s264
        %s266 = sand.u32 %s118, 1
        %s267 = smul.addr %s266, 512
        %s268 = scalar_lea.vmem [#allocation8], %s267
        %p269 = pneg %p159
        %p270 = pneg %p156
        %s271 = sand.u32 %s146, 1
        %s272 = scalar_lea.sflag [#allocation10], %s271
        %s273 = sand.u32 %s146, 1
        %s274 = smul.addr %s273, 512
        %s275 = scalar_lea.vmem [#allocation9], %s274
        %s276 = smul.u32 64, %s31
        %s277 = smul.u32 64, %s31
        %s278 = smul.u32 64, %s31
        %v280 = vld [vmem:[%s238] sm:$0xff]
        %v281 = vld [vmem:[%s238 + $0x8] sm:$0xff]
        %v282 = vld [vmem:[%s238 + $0x10] sm:$0xff]
        %v283 = vld [vmem:[%s238 + $0x18] sm:$0xff]
        %v284 = vld [vmem:[%s238 + $0x20] sm:$0xff]
        %v285 = vld [vmem:[%s238 + $0x28] sm:$0xff]
        %v286 = vld [vmem:[%s238 + $0x30] sm:$0xff]
        %v287 = vld [vmem:[%s238 + $0x38] sm:$0xff]
        %v288 = vld [vmem:[%s238 + $0x40] sm:$0xff]
        %v289 = vld [vmem:[%s238 + $0x48] sm:$0xff]
        %v290 = vld [vmem:[%s238 + $0x50] sm:$0xff]
        %v291 = vld [vmem:[%s238 + $0x58] sm:$0xff]
        %v292 = vld [vmem:[%s238 + $0x60] sm:$0xff]
        %v293 = vld [vmem:[%s238 + $0x68] sm:$0xff]
        %v294 = vld [vmem:[%s238 + $0x70] sm:$0xff]
        %v295 = vld [vmem:[%s238 + $0x78] sm:$0xff]
        %v296 = vld [vmem:[%s238 + $0x80] sm:$0xff]
        %v297 = vld [vmem:[%s238 + $0x88] sm:$0xff]
        %v298 = vld [vmem:[%s238 + $0x90] sm:$0xff]
        %v299 = vld [vmem:[%s238 + $0x98] sm:$0xff]
        %v300 = vld [vmem:[%s238 + $0xa0] sm:$0xff]
        %v301 = vld [vmem:[%s238 + $0xa8] sm:$0xff]
        %v302 = vld [vmem:[%s238 + $0xb0] sm:$0xff]
        %v303 = vld [vmem:[%s238 + $0xb8] sm:$0xff]
        %v304 = vld [vmem:[%s238 + $0xc0] sm:$0xff]
        %v305 = vld [vmem:[%s238 + $0xc8] sm:$0xff]
        %v306 = vld [vmem:[%s238 + $0xd0] sm:$0xff]
        %v307 = vld [vmem:[%s238 + $0xd8] sm:$0xff]
        %v308 = vld [vmem:[%s238 + $0xe0] sm:$0xff]
        %v309 = vld [vmem:[%s238 + $0xe8] sm:$0xff]
        %v310 = vld [vmem:[%s238 + $0xf0] sm:$0xff]
        %v311 = vld [vmem:[%s238 + $0xf8] sm:$0xff]
        %v312 = vld [vmem:[%s238 + $0x100] sm:$0xff]
        %v313 = vld [vmem:[%s238 + $0x108] sm:$0xff]
        %v314 = vld [vmem:[%s238 + $0x110] sm:$0xff]
        %v315 = vld [vmem:[%s238 + $0x118] sm:$0xff]
        %v316 = vld [vmem:[%s238 + $0x120] sm:$0xff]
        %v317 = vld [vmem:[%s238 + $0x128] sm:$0xff]
        %v318 = vld [vmem:[%s238 + $0x130] sm:$0xff]
        %v319 = vld [vmem:[%s238 + $0x138] sm:$0xff]
        %v320 = vld [vmem:[%s238 + $0x140] sm:$0xff]
        %v321 = vld [vmem:[%s238 + $0x148] sm:$0xff]
        %v322 = vld [vmem:[%s238 + $0x150] sm:$0xff]
        %v323 = vld [vmem:[%s238 + $0x158] sm:$0xff]
        %v324 = vld [vmem:[%s238 + $0x160] sm:$0xff]
        %v325 = vld [vmem:[%s238 + $0x168] sm:$0xff]
        %v326 = vld [vmem:[%s238 + $0x170] sm:$0xff]
        %v327 = vld [vmem:[%s238 + $0x178] sm:$0xff]
        %v328 = vld [vmem:[%s238 + $0x180] sm:$0xff]
        %v329 = vld [vmem:[%s238 + $0x188] sm:$0xff]
        %v330 = vld [vmem:[%s238 + $0x190] sm:$0xff]
        %v331 = vld [vmem:[%s238 + $0x198] sm:$0xff]
        %v332 = vld [vmem:[%s238 + $0x1a0] sm:$0xff]
        %v333 = vld [vmem:[%s238 + $0x1a8] sm:$0xff]
        %v334 = vld [vmem:[%s238 + $0x1b0] sm:$0xff]
        %v335 = vld [vmem:[%s238 + $0x1b8] sm:$0xff]
        %v336 = vld [vmem:[%s238 + $0x1c0] sm:$0xff]
        %v337 = vld [vmem:[%s238 + $0x1c8] sm:$0xff]
        %v338 = vld [vmem:[%s238 + $0x1d0] sm:$0xff]
        %v339 = vld [vmem:[%s238 + $0x1d8] sm:$0xff]
        %v340 = vld [vmem:[%s238 + $0x1e0] sm:$0xff]
        %v341 = vld [vmem:[%s238 + $0x1e8] sm:$0xff]
        %v342 = vld [vmem:[%s238 + $0x1f0] sm:$0xff]
        %v343 = vld [vmem:[%s238 + $0x1f8] sm:$0xff]
        %v344 = vpack.c.bf16 %v281, %v280
        %v345 = vpack.c.bf16 %v283, %v282
        %v346 = vpack.c.bf16 %v285, %v284
        %v347 = vpack.c.bf16 %v287, %v286
        %v348 = vpack.c.bf16 %v289, %v288
        %v349 = vpack.c.bf16 %v291, %v290
        %v350 = vpack.c.bf16 %v293, %v292
        %v351 = vpack.c.bf16 %v295, %v294
        %v352 = vpack.c.bf16 %v297, %v296
        %v353 = vpack.c.bf16 %v299, %v298
        %v354 = vpack.c.bf16 %v301, %v300
        %v355 = vpack.c.bf16 %v303, %v302
        %v356 = vpack.c.bf16 %v305, %v304
        %v357 = vpack.c.bf16 %v307, %v306
        %v358 = vpack.c.bf16 %v309, %v308
        %v359 = vpack.c.bf16 %v311, %v310
        %v360 = vpack.c.bf16 %v313, %v312
        %v361 = vpack.c.bf16 %v315, %v314
        %v362 = vpack.c.bf16 %v317, %v316
        %v363 = vpack.c.bf16 %v319, %v318
        %v364 = vpack.c.bf16 %v321, %v320
        %v365 = vpack.c.bf16 %v323, %v322
        %v366 = vpack.c.bf16 %v325, %v324
        %v367 = vpack.c.bf16 %v327, %v326
        %v368 = vpack.c.bf16 %v329, %v328
        %v369 = vpack.c.bf16 %v331, %v330
        %v370 = vpack.c.bf16 %v333, %v332
        %v371 = vpack.c.bf16 %v335, %v334
        %v372 = vpack.c.bf16 %v337, %v336
        %v373 = vpack.c.bf16 %v339, %v338
        %v374 = vpack.c.bf16 %v341, %v340
        %v375 = vpack.c.bf16 %v343, %v342
        %v376 = vld [vmem:[#allocation5] sm:$0xff]
        %v377 = vld [vmem:[#allocation5 + $0x8] sm:$0xff]
        %v378 = vld [vmem:[#allocation5 + $0x10] sm:$0xff]
        %v379 = vld [vmem:[#allocation5 + $0x18] sm:$0xff]
        %v380 = vld [vmem:[#allocation5 + $0x20] sm:$0xff]
        %v381 = vld [vmem:[#allocation5 + $0x28] sm:$0xff]
        %v382 = vld [vmem:[#allocation5 + $0x30] sm:$0xff]
        %v383 = vld [vmem:[#allocation5 + $0x38] sm:$0xff]
        %v384 = vld [vmem:[#allocation5 + $0x40] sm:$0xff]
        %v385 = vld [vmem:[#allocation5 + $0x48] sm:$0xff]
        %v386 = vld [vmem:[#allocation5 + $0x50] sm:$0xff]
        %v387 = vld [vmem:[#allocation5 + $0x58] sm:$0xff]
        %v388 = vld [vmem:[#allocation5 + $0x60] sm:$0xff]
        %v389 = vld [vmem:[#allocation5 + $0x68] sm:$0xff]
        %v390 = vld [vmem:[#allocation5 + $0x70] sm:$0xff]
        %v391 = vld [vmem:[#allocation5 + $0x78] sm:$0xff]
        %v392 = vpack.c.bf16 %v377, %v376
        %v393 = vpack.c.bf16 %v379, %v378
        %v394 = vpack.c.bf16 %v381, %v380
        %v395 = vpack.c.bf16 %v383, %v382
        %v396 = vpack.c.bf16 %v385, %v384
        %v397 = vpack.c.bf16 %v387, %v386
        %v398 = vpack.c.bf16 %v389, %v388
        %v399 = vpack.c.bf16 %v391, %v390
        %400 = vmatprep.subr.bf16.mxu0 0
        %401 = vmatpush1.bf16.xpose.msra.mxu0 %v392
        %402 = vmatprep.subr.bf16.mxu0 0
        %403 = vmatpush1.bf16.xpose.msra.mxu0 %v393
        %404 = vmatprep.subr.bf16.mxu0 0
        %405 = vmatpush1.bf16.xpose.msra.mxu0 %v394
        %406 = vmatprep.subr.bf16.mxu0 0
        %407 = vmatpush1.bf16.xpose.msra.mxu0 %v395
        %408 = vmatprep.subr.bf16.mxu0 0
        %409 = vmatpush1.bf16.xpose.msra.mxu0 %v396
        %410 = vmatprep.subr.bf16.mxu0 0
        %411 = vmatpush1.bf16.xpose.msra.mxu0 %v397
        %412 = vmatprep.subr.bf16.mxu0 0
        %413 = vmatpush1.bf16.xpose.msra.mxu0 %v398
        %414 = vmatprep.subr.bf16.mxu0 0
        %415 = vmatpush1.bf16.xpose.msra.mxu0 %v399
        %416 = vmatprep.subr.bf16.mxu0 0
        %417 = vmatpush1.bf16.xpose.msra.mxu0 0
        %418 = vmatprep.subr.bf16.mxu0 0
        %419 = vmatpush1.bf16.xpose.msra.mxu0 0
        %420 = vmatprep.subr.bf16.mxu0 0
        %421 = vmatpush1.bf16.xpose.msra.mxu0 0
        %422 = vmatprep.subr.bf16.mxu0 0
        %423 = vmatpush1.bf16.xpose.msra.mxu0 0
        %424 = vmatprep.subr.bf16.mxu0 0
        %425 = vmatpush1.bf16.xpose.msra.mxu0 0
        %426 = vmatprep.subr.bf16.mxu0 0
        %427 = vmatpush1.bf16.xpose.msra.mxu0 0
        %428 = vmatprep.subr.bf16.mxu0 0
        %429 = vmatpush1.bf16.xpose.msra.mxu0 0
        %430 = vmatprep.subr.bf16.mxu0 0
        %431 = vmatpush1.bf16.xpose.msra.mxu0 0
        %432 = vmatprep.mubr.bf16.mxu0 0
        %433 = vmatmul.mubr.bf16.gmra.mrb[0].mxu0 %v344
        %v434 = vpop.f32.mrb[0].mxu0
        %v435 = vadd.f32 0.0, %v434
        %v436 = vpop.f32.mrb[0].mxu0
        %v437 = vpop.f32.mrb[0].mxu0
        %v438 = vadd.f32 0.0, %v437
        %v439 = vpop.f32.mrb[0].mxu0
        %440 = vmatprep.mubr.bf16.mxu0 0
        %441 = vmatmul.mubr.bf16.gmra.mrb[0].mxu0 %v345
        %v442 = vpop.f32.mrb[0].mxu0
        %v443 = vadd.f32 0.0, %v442
        %v444 = vpop.f32.mrb[0].mxu0
        %v445 = vpop.f32.mrb[0].mxu0
        %v446 = vadd.f32 0.0, %v445
        %v447 = vpop.f32.mrb[0].mxu0
        %448 = vmatprep.mubr.bf16.mxu0 0
        %449 = vmatmul.mubr.bf16.gmra.mrb[0].mxu0 %v346
        %v450 = vpop.f32.mrb[0].mxu0
        %v451 = vadd.f32 0.0, %v450
        %v452 = vpop.f32.mrb[0].mxu0
        %v453 = vpop.f32.mrb[0].mxu0
        %v454 = vadd.f32 0.0, %v453
        %v455 = vpop.f32.mrb[0].mxu0
        %456 = vmatprep.mubr.bf16.mxu0 0
        %457 = vmatmul.mubr.bf16.gmra.mrb[0].mxu0 %v347
        %v458 = vpop.f32.mrb[0].mxu0
        %v459 = vadd.f32 0.0, %v458
        %v460 = vpop.f32.mrb[0].mxu0
        %v461 = vpop.f32.mrb[0].mxu0
        %v462 = vadd.f32 0.0, %v461
        %v463 = vpop.f32.mrb[0].mxu0
        %464 = vmatprep.mubr.bf16.mxu0 0
        %465 = vmatmul.mubr.bf16.gmra.mrb[0].mxu0 %v348
        %v466 = vpop.f32.mrb[0].mxu0
        %v467 = vadd.f32 0.0, %v466
        %v468 = vpop.f32.mrb[0].mxu0
        %v469 = vpop.f32.mrb[0].mxu0
        %v470 = vadd.f32 0.0, %v469
        %v471 = vpop.f32.mrb[0].mxu0
        %472 = vmatprep.mubr.bf16.mxu0 0
        %473 = vmatmul.mubr.bf16.gmra.mrb[0].mxu0 %v349
        %v474 = vpop.f32.mrb[0].mxu0
        %v475 = vadd.f32 0.0, %v474
        %v476 = vpop.f32.mrb[0].mxu0
        %v477 = vpop.f32.mrb[0].mxu0
        %v478 = vadd.f32 0.0, %v477
        %v479 = vpop.f32.mrb[0].mxu0
        %480 = vmatprep.mubr.bf16.mxu0 0
        %481 = vmatmul.mubr.bf16.gmra.mrb[0].mxu0 %v350
        %v482 = vpop.f32.mrb[0].mxu0
        %v483 = vadd.f32 0.0, %v482
        %v484 = vpop.f32.mrb[0].mxu0
        %v485 = vpop.f32.mrb[0].mxu0
        %v486 = vadd.f32 0.0, %v485
        %v487 = vpop.f32.mrb[0].mxu0
        %488 = vmatprep.mubr.bf16.mxu0 0
        %489 = vmatmul.mubr.bf16.gmra.mrb[0].mxu0 %v351
        %v490 = vpop.f32.mrb[0].mxu0
        %v491 = vadd.f32 0.0, %v490
        %v492 = vpop.f32.mrb[0].mxu0
        %v493 = vpop.f32.mrb[0].mxu0
        %v494 = vadd.f32 0.0, %v493
        %v495 = vpop.f32.mrb[0].mxu0
        %496 = vmatprep.mubr.bf16.mxu0 0
        %497 = vmatmul.mubr.bf16.gmra.mrb[0].mxu0 %v352
        %v498 = vpop.f32.mrb[0].mxu0
        %v499 = vadd.f32 0.0, %v498
        %v500 = vpop.f32.mrb[0].mxu0
        %v501 = vpop.f32.mrb[0].mxu0
        %v502 = vadd.f32 0.0, %v501
        %v503 = vpop.f32.mrb[0].mxu0
        %504 = vmatprep.mubr.bf16.mxu0 0
        %505 = vmatmul.mubr.bf16.gmra.mrb[0].mxu0 %v353
        %v506 = vpop.f32.mrb[0].mxu0
        %v507 = vadd.f32 0.0, %v506
        %v508 = vpop.f32.mrb[0].mxu0
        %v509 = vpop.f32.mrb[0].mxu0
        %v510 = vadd.f32 0.0, %v509
        %v511 = vpop.f32.mrb[0].mxu0
        %512 = vmatprep.mubr.bf16.mxu0 0
        %513 = vmatmul.mubr.bf16.gmra.mrb[0].mxu0 %v354
        %v514 = vpop.f32.mrb[0].mxu0
        %v515 = vadd.f32 0.0, %v514
        %v516 = vpop.f32.mrb[0].mxu0
        %v517 = vpop.f32.mrb[0].mxu0
        %v518 = vadd.f32 0.0, %v517
        %v519 = vpop.f32.mrb[0].mxu0
        %520 = vmatprep.mubr.bf16.mxu0 0
        %521 = vmatmul.mubr.bf16.gmra.mrb[0].mxu0 %v355
        %v522 = vpop.f32.mrb[0].mxu0
        %v523 = vadd.f32 0.0, %v522
        %v524 = vpop.f32.mrb[0].mxu0
        %v525 = vpop.f32.mrb[0].mxu0
        %v526 = vadd.f32 0.0, %v525
        %v527 = vpop.f32.mrb[0].mxu0
        %528 = vmatprep.mubr.bf16.mxu0 0
        %529 = vmatmul.mubr.bf16.gmra.mrb[0].mxu0 %v356
        %v530 = vpop.f32.mrb[0].mxu0
        %v531 = vadd.f32 0.0, %v530
        %v532 = vpop.f32.mrb[0].mxu0
        %v533 = vpop.f32.mrb[0].mxu0
        %v534 = vadd.f32 0.0, %v533
        %v535 = vpop.f32.mrb[0].mxu0
        %536 = vmatprep.mubr.bf16.mxu0 0
        %537 = vmatmul.mubr.bf16.gmra.mrb[0].mxu0 %v357
        %v538 = vpop.f32.mrb[0].mxu0
        %v539 = vadd.f32 0.0, %v538
        %v540 = vpop.f32.mrb[0].mxu0
        %v541 = vpop.f32.mrb[0].mxu0
        %v542 = vadd.f32 0.0, %v541
        %v543 = vpop.f32.mrb[0].mxu0
        %544 = vmatprep.mubr.bf16.mxu0 0
        %545 = vmatmul.mubr.bf16.gmra.mrb[0].mxu0 %v358
        %v546 = vpop.f32.mrb[0].mxu0
        %v547 = vadd.f32 0.0, %v546
        %v548 = vpop.f32.mrb[0].mxu0
        %v549 = vpop.f32.mrb[0].mxu0
        %v550 = vadd.f32 0.0, %v549
        %v551 = vpop.f32.mrb[0].mxu0
        %552 = vmatprep.mubr.bf16.mxu0 0
        %553 = vmatmul.mubr.bf16.gmra.mrb[0].mxu0 %v359
        %v554 = vpop.f32.mrb[0].mxu0
        %v555 = vadd.f32 0.0, %v554
        %v556 = vpop.f32.mrb[0].mxu0
        %v557 = vpop.f32.mrb[0].mxu0
        %v558 = vadd.f32 0.0, %v557
        %v559 = vpop.f32.mrb[0].mxu0
        %560 = vmatprep.mubr.bf16.mxu0 0
        %561 = vmatmul.mubr.bf16.gmra.mrb[0].mxu0 %v360
        %v562 = vpop.f32.mrb[0].mxu0
        %v563 = vadd.f32 0.0, %v562
        %v564 = vpop.f32.mrb[0].mxu0
        %v565 = vpop.f32.mrb[0].mxu0
        %v566 = vadd.f32 0.0, %v565
        %v567 = vpop.f32.mrb[0].mxu0
        %568 = vmatprep.mubr.bf16.mxu0 0
        %569 = vmatmul.mubr.bf16.gmra.mrb[0].mxu0 %v361
        %v570 = vpop.f32.mrb[0].mxu0
        %v571 = vadd.f32 0.0, %v570
        %v572 = vpop.f32.mrb[0].mxu0
        %v573 = vpop.f32.mrb[0].mxu0
        %v574 = vadd.f32 0.0, %v573
        %v575 = vpop.f32.mrb[0].mxu0
        %576 = vmatprep.mubr.bf16.mxu0 0
        %577 = vmatmul.mubr.bf16.gmra.mrb[0].mxu0 %v362
        %v578 = vpop.f32.mrb[0].mxu0
        %v579 = vadd.f32 0.0, %v578
        %v580 = vpop.f32.mrb[0].mxu0
        %v581 = vpop.f32.mrb[0].mxu0
        %v582 = vadd.f32 0.0, %v581
        %v583 = vpop.f32.mrb[0].mxu0
        %584 = vmatprep.mubr.bf16.mxu0 0
        %585 = vmatmul.mubr.bf16.gmra.mrb[0].mxu0 %v363
        %v586 = vpop.f32.mrb[0].mxu0
        %v587 = vadd.f32 0.0, %v586
        %v588 = vpop.f32.mrb[0].mxu0
        %v589 = vpop.f32.mrb[0].mxu0
        %v590 = vadd.f32 0.0, %v589
        %v591 = vpop.f32.mrb[0].mxu0
        %592 = vmatprep.mubr.bf16.mxu0 0
        %593 = vmatmul.mubr.bf16.gmra.mrb[0].mxu0 %v364
        %v594 = vpop.f32.mrb[0].mxu0
        %v595 = vadd.f32 0.0, %v594
        %v596 = vpop.f32.mrb[0].mxu0
        %v597 = vpop.f32.mrb[0].mxu0
        %v598 = vadd.f32 0.0, %v597
        %v599 = vpop.f32.mrb[0].mxu0
        %600 = vmatprep.mubr.bf16.mxu0 0
        %601 = vmatmul.mubr.bf16.gmra.mrb[0].mxu0 %v365
        %v602 = vpop.f32.mrb[0].mxu0
        %v603 = vadd.f32 0.0, %v602
        %v604 = vpop.f32.mrb[0].mxu0
        %v605 = vpop.f32.mrb[0].mxu0
        %v606 = vadd.f32 0.0, %v605
        %v607 = vpop.f32.mrb[0].mxu0
        %608 = vmatprep.mubr.bf16.mxu0 0
        %609 = vmatmul.mubr.bf16.gmra.mrb[0].mxu0 %v366
        %v610 = vpop.f32.mrb[0].mxu0
        %v611 = vadd.f32 0.0, %v610
        %v612 = vpop.f32.mrb[0].mxu0
        %v613 = vpop.f32.mrb[0].mxu0
        %v614 = vadd.f32 0.0, %v613
        %v615 = vpop.f32.mrb[0].mxu0
        %616 = vmatprep.mubr.bf16.mxu0 0
        %617 = vmatmul.mubr.bf16.gmra.mrb[0].mxu0 %v367
        %v618 = vpop.f32.mrb[0].mxu0
        %v619 = vadd.f32 0.0, %v618
        %v620 = vpop.f32.mrb[0].mxu0
        %v621 = vpop.f32.mrb[0].mxu0
        %v622 = vadd.f32 0.0, %v621
        %v623 = vpop.f32.mrb[0].mxu0
        %624 = vmatprep.mubr.bf16.mxu0 0
        %625 = vmatmul.mubr.bf16.gmra.mrb[0].mxu0 %v368
        %v626 = vpop.f32.mrb[0].mxu0
        %v627 = vadd.f32 0.0, %v626
        %v628 = vpop.f32.mrb[0].mxu0
        %v629 = vpop.f32.mrb[0].mxu0
        %v630 = vadd.f32 0.0, %v629
        %v631 = vpop.f32.mrb[0].mxu0
        %632 = vmatprep.mubr.bf16.mxu0 0
        %633 = vmatmul.mubr.bf16.gmra.mrb[0].mxu0 %v369
        %v634 = vpop.f32.mrb[0].mxu0
        %v635 = vadd.f32 0.0, %v634
        %v636 = vpop.f32.mrb[0].mxu0
        %v637 = vpop.f32.mrb[0].mxu0
        %v638 = vadd.f32 0.0, %v637
        %v639 = vpop.f32.mrb[0].mxu0
        %640 = vmatprep.mubr.bf16.mxu0 0
        %641 = vmatmul.mubr.bf16.gmra.mrb[0].mxu0 %v370
        %v642 = vpop.f32.mrb[0].mxu0
        %v643 = vadd.f32 0.0, %v642
        %v644 = vpop.f32.mrb[0].mxu0
        %v645 = vpop.f32.mrb[0].mxu0
        %v646 = vadd.f32 0.0, %v645
        %v647 = vpop.f32.mrb[0].mxu0
        %648 = vmatprep.mubr.bf16.mxu0 0
        %649 = vmatmul.mubr.bf16.gmra.mrb[0].mxu0 %v371
        %v650 = vpop.f32.mrb[0].mxu0
        %v651 = vadd.f32 0.0, %v650
        %v652 = vpop.f32.mrb[0].mxu0
        %v653 = vpop.f32.mrb[0].mxu0
        %v654 = vadd.f32 0.0, %v653
        %v655 = vpop.f32.mrb[0].mxu0
        %656 = vmatprep.mubr.bf16.mxu0 0
        %657 = vmatmul.mubr.bf16.gmra.mrb[0].mxu0 %v372
        %v658 = vpop.f32.mrb[0].mxu0
        %v659 = vadd.f32 0.0, %v658
        %v660 = vpop.f32.mrb[0].mxu0
        %v661 = vpop.f32.mrb[0].mxu0
        %v662 = vadd.f32 0.0, %v661
        %v663 = vpop.f32.mrb[0].mxu0
        %664 = vmatprep.mubr.bf16.mxu0 0
        %665 = vmatmul.mubr.bf16.gmra.mrb[0].mxu0 %v373
        %v666 = vpop.f32.mrb[0].mxu0
        %v667 = vadd.f32 0.0, %v666
        %v668 = vpop.f32.mrb[0].mxu0
        %v669 = vpop.f32.mrb[0].mxu0
        %v670 = vadd.f32 0.0, %v669
        %v671 = vpop.f32.mrb[0].mxu0
        %672 = vmatprep.mubr.bf16.mxu0 0
        %673 = vmatmul.mubr.bf16.gmra.mrb[0].mxu0 %v374
        %v674 = vpop.f32.mrb[0].mxu0
        %v675 = vadd.f32 0.0, %v674
        %v676 = vpop.f32.mrb[0].mxu0
        %v677 = vpop.f32.mrb[0].mxu0
        %v678 = vadd.f32 0.0, %v677
        %v679 = vpop.f32.mrb[0].mxu0
        %680 = vmatprep.mubr.bf16.mxu0 0
        %681 = vmatmul.mubr.bf16.gmra.mrb[0].mxu0 %v375
        %v682 = vpop.f32.mrb[0].mxu0
        %v683 = vadd.f32 0.0, %v682
        %v684 = vpop.f32.mrb[0].mxu0
        %v685 = vpop.f32.mrb[0].mxu0
        %v686 = vadd.f32 0.0, %v685
        %v687 = vpop.f32.mrb[0].mxu0
        %688 = vdwg.mxu0
        %v689 = vld [vmem:[#allocation7] sm:$0xff]
        %v690 = vld [vmem:[#allocation7 + $0x8] sm:$0xff]
        %v691 = vld [vmem:[#allocation7 + $0x10] sm:$0xff]
        %v692 = vld [vmem:[#allocation7 + $0x18] sm:$0xff]
        %v693 = vld [vmem:[#allocation7 + $0x20] sm:$0xff]
        %v694 = vld [vmem:[#allocation7 + $0x28] sm:$0xff]
        %v695 = vld [vmem:[#allocation7 + $0x30] sm:$0xff]
        %v696 = vld [vmem:[#allocation7 + $0x38] sm:$0xff]
        %v697 = vld [vmem:[#allocation7 + $0x40] sm:$0xff]
        %v698 = vld [vmem:[#allocation7 + $0x48] sm:$0xff]
        %v699 = vld [vmem:[#allocation7 + $0x50] sm:$0xff]
        %v700 = vld [vmem:[#allocation7 + $0x58] sm:$0xff]
        %v701 = vld [vmem:[#allocation7 + $0x60] sm:$0xff]
        %v702 = vld [vmem:[#allocation7 + $0x68] sm:$0xff]
        %v703 = vld [vmem:[#allocation7 + $0x70] sm:$0xff]
        %v704 = vld [vmem:[#allocation7 + $0x78] sm:$0xff]
        %v705 = vpack.c.bf16 %v690, %v689
        %v706 = vpack.c.bf16 %v692, %v691
        %v707 = vpack.c.bf16 %v694, %v693
        %v708 = vpack.c.bf16 %v696, %v695
        %v709 = vpack.c.bf16 %v698, %v697
        %v710 = vpack.c.bf16 %v700, %v699
        %v711 = vpack.c.bf16 %v702, %v701
        %v712 = vpack.c.bf16 %v704, %v703
        %713 = vmatprep.subr.bf16.mxu0 0
        %714 = vmatpush1.bf16.xpose.msra.mxu0 %v705
        %715 = vmatprep.subr.bf16.mxu0 0
        %716 = vmatpush1.bf16.xpose.msra.mxu0 %v706
        %717 = vmatprep.subr.bf16.mxu0 0
        %718 = vmatpush1.bf16.xpose.msra.mxu0 %v707
        %719 = vmatprep.subr.bf16.mxu0 0
        %720 = vmatpush1.bf16.xpose.msra.mxu0 %v708
        %721 = vmatprep.subr.bf16.mxu0 0
        %722 = vmatpush1.bf16.xpose.msra.mxu0 %v709
        %723 = vmatprep.subr.bf16.mxu0 0
        %724 = vmatpush1.bf16.xpose.msra.mxu0 %v710
        %725 = vmatprep.subr.bf16.mxu0 0
        %726 = vmatpush1.bf16.xpose.msra.mxu0 %v711
        %727 = vmatprep.subr.bf16.mxu0 0
        %728 = vmatpush1.bf16.xpose.msra.mxu0 %v712
        %729 = vmatprep.subr.bf16.mxu0 0
        %730 = vmatpush1.bf16.xpose.msra.mxu0 0
        %731 = vmatprep.subr.bf16.mxu0 0
        %732 = vmatpush1.bf16.xpose.msra.mxu0 0
        %733 = vmatprep.subr.bf16.mxu0 0
        %734 = vmatpush1.bf16.xpose.msra.mxu0 0
        %735 = vmatprep.subr.bf16.mxu0 0
        %736 = vmatpush1.bf16.xpose.msra.mxu0 0
        %737 = vmatprep.subr.bf16.mxu0 0
        %738 = vmatpush1.bf16.xpose.msra.mxu0 0
        %739 = vmatprep.subr.bf16.mxu0 0
        %740 = vmatpush1.bf16.xpose.msra.mxu0 0
        %741 = vmatprep.subr.bf16.mxu0 0
        %742 = vmatpush1.bf16.xpose.msra.mxu0 0
        %743 = vmatprep.subr.bf16.mxu0 0
        %744 = vmatpush1.bf16.xpose.msra.mxu0 0
        %745 = vmatprep.mubr.bf16.mxu0 0
        %746 = vmatmul.mubr.bf16.gmra.mrb[0].mxu0 %v344
        %v747 = vpop.f32.mrb[0].mxu0
        %v748 = vadd.f32 0.0, %v747
        %v749 = vpop.f32.mrb[0].mxu0
        %v750 = vpop.f32.mrb[0].mxu0
        %v751 = vadd.f32 0.0, %v750
        %v752 = vpop.f32.mrb[0].mxu0
        %753 = vmatprep.mubr.bf16.mxu0 0
        %754 = vmatmul.mubr.bf16.gmra.mrb[0].mxu0 %v345
        %v755 = vpop.f32.mrb[0].mxu0
        %v756 = vadd.f32 0.0, %v755
        %v757 = vpop.f32.mrb[0].mxu0
        %v758 = vpop.f32.mrb[0].mxu0
        %v759 = vadd.f32 0.0, %v758
        %v760 = vpop.f32.mrb[0].mxu0
        %761 = vmatprep.mubr.bf16.mxu0 0
        %762 = vmatmul.mubr.bf16.gmra.mrb[0].mxu0 %v346
        %v763 = vpop.f32.mrb[0].mxu0
        %v764 = vadd.f32 0.0, %v763
        %v765 = vpop.f32.mrb[0].mxu0
        %v766 = vpop.f32.mrb[0].mxu0
        %v767 = vadd.f32 0.0, %v766
        %v768 = vpop.f32.mrb[0].mxu0
        %769 = vmatprep.mubr.bf16.mxu0 0
        %770 = vmatmul.mubr.bf16.gmra.mrb[0].mxu0 %v347
        %v771 = vpop.f32.mrb[0].mxu0
        %v772 = vadd.f32 0.0, %v771
        %v773 = vpop.f32.mrb[0].mxu0
        %v774 = vpop.f32.mrb[0].mxu0
        %v775 = vadd.f32 0.0, %v774
        %v776 = vpop.f32.mrb[0].mxu0
        %777 = vmatprep.mubr.bf16.mxu0 0
        %778 = vmatmul.mubr.bf16.gmra.mrb[0].mxu0 %v348
        %v779 = vpop.f32.mrb[0].mxu0
        %v780 = vadd.f32 0.0, %v779
        %v781 = vpop.f32.mrb[0].mxu0
        %v782 = vpop.f32.mrb[0].mxu0
        %v783 = vadd.f32 0.0, %v782
        %v784 = vpop.f32.mrb[0].mxu0
        %785 = vmatprep.mubr.bf16.mxu0 0
        %786 = vmatmul.mubr.bf16.gmra.mrb[0].mxu0 %v349
        %v787 = vpop.f32.mrb[0].mxu0
        %v788 = vadd.f32 0.0, %v787
        %v789 = vpop.f32.mrb[0].mxu0
        %v790 = vpop.f32.mrb[0].mxu0
        %v791 = vadd.f32 0.0, %v790
        %v792 = vpop.f32.mrb[0].mxu0
        %793 = vmatprep.mubr.bf16.mxu0 0
        %794 = vmatmul.mubr.bf16.gmra.mrb[0].mxu0 %v350
        %v795 = vpop.f32.mrb[0].mxu0
        %v796 = vadd.f32 0.0, %v795
        %v797 = vpop.f32.mrb[0].mxu0
        %v798 = vpop.f32.mrb[0].mxu0
        %v799 = vadd.f32 0.0, %v798
        %v800 = vpop.f32.mrb[0].mxu0
        %801 = vmatprep.mubr.bf16.mxu0 0
        %802 = vmatmul.mubr.bf16.gmra.mrb[0].mxu0 %v351
        %v803 = vpop.f32.mrb[0].mxu0
        %v804 = vadd.f32 0.0, %v803
        %v805 = vpop.f32.mrb[0].mxu0
        %v806 = vpop.f32.mrb[0].mxu0
        %v807 = vadd.f32 0.0, %v806
        %v808 = vpop.f32.mrb[0].mxu0
        %809 = vmatprep.mubr.bf16.mxu0 0
        %810 = vmatmul.mubr.bf16.gmra.mrb[0].mxu0 %v352
        %v811 = vpop.f32.mrb[0].mxu0
        %v812 = vadd.f32 0.0, %v811
        %v813 = vpop.f32.mrb[0].mxu0
        %v814 = vpop.f32.mrb[0].mxu0
        %v815 = vadd.f32 0.0, %v814
        %v816 = vpop.f32.mrb[0].mxu0
        %817 = vmatprep.mubr.bf16.mxu0 0
        %818 = vmatmul.mubr.bf16.gmra.mrb[0].mxu0 %v353
        %v819 = vpop.f32.mrb[0].mxu0
        %v820 = vadd.f32 0.0, %v819
        %v821 = vpop.f32.mrb[0].mxu0
        %v822 = vpop.f32.mrb[0].mxu0
        %v823 = vadd.f32 0.0, %v822
        %v824 = vpop.f32.mrb[0].mxu0
        %825 = vmatprep.mubr.bf16.mxu0 0
        %826 = vmatmul.mubr.bf16.gmra.mrb[0].mxu0 %v354
        %v827 = vpop.f32.mrb[0].mxu0
        %v828 = vadd.f32 0.0, %v827
        %v829 = vpop.f32.mrb[0].mxu0
        %v830 = vpop.f32.mrb[0].mxu0
        %v831 = vadd.f32 0.0, %v830
        %v832 = vpop.f32.mrb[0].mxu0
        %833 = vmatprep.mubr.bf16.mxu0 0
        %834 = vmatmul.mubr.bf16.gmra.mrb[0].mxu0 %v355
        %v835 = vpop.f32.mrb[0].mxu0
        %v836 = vadd.f32 0.0, %v835
        %v837 = vpop.f32.mrb[0].mxu0
        %v838 = vpop.f32.mrb[0].mxu0
        %v839 = vadd.f32 0.0, %v838
        %v840 = vpop.f32.mrb[0].mxu0
        %841 = vmatprep.mubr.bf16.mxu0 0
        %842 = vmatmul.mubr.bf16.gmra.mrb[0].mxu0 %v356
        %v843 = vpop.f32.mrb[0].mxu0
        %v844 = vadd.f32 0.0, %v843
        %v845 = vpop.f32.mrb[0].mxu0
        %v846 = vpop.f32.mrb[0].mxu0
        %v847 = vadd.f32 0.0, %v846
        %v848 = vpop.f32.mrb[0].mxu0
        %849 = vmatprep.mubr.bf16.mxu0 0
        %850 = vmatmul.mubr.bf16.gmra.mrb[0].mxu0 %v357
        %v851 = vpop.f32.mrb[0].mxu0
        %v852 = vadd.f32 0.0, %v851
        %v853 = vpop.f32.mrb[0].mxu0
        %v854 = vpop.f32.mrb[0].mxu0
        %v855 = vadd.f32 0.0, %v854
        %v856 = vpop.f32.mrb[0].mxu0
        %857 = vmatprep.mubr.bf16.mxu0 0
        %858 = vmatmul.mubr.bf16.gmra.mrb[0].mxu0 %v358
        %v859 = vpop.f32.mrb[0].mxu0
        %v860 = vadd.f32 0.0, %v859
        %v861 = vpop.f32.mrb[0].mxu0
        %v862 = vpop.f32.mrb[0].mxu0
        %v863 = vadd.f32 0.0, %v862
        %v864 = vpop.f32.mrb[0].mxu0
        %865 = vmatprep.mubr.bf16.mxu0 0
        %866 = vmatmul.mubr.bf16.gmra.mrb[0].mxu0 %v359
        %v867 = vpop.f32.mrb[0].mxu0
        %v868 = vadd.f32 0.0, %v867
        %v869 = vpop.f32.mrb[0].mxu0
        %v870 = vpop.f32.mrb[0].mxu0
        %v871 = vadd.f32 0.0, %v870
        %v872 = vpop.f32.mrb[0].mxu0
        %873 = vmatprep.mubr.bf16.mxu0 0
        %874 = vmatmul.mubr.bf16.gmra.mrb[0].mxu0 %v360
        %v875 = vpop.f32.mrb[0].mxu0
        %v876 = vadd.f32 0.0, %v875
        %v877 = vpop.f32.mrb[0].mxu0
        %v878 = vpop.f32.mrb[0].mxu0
        %v879 = vadd.f32 0.0, %v878
        %v880 = vpop.f32.mrb[0].mxu0
        %881 = vmatprep.mubr.bf16.mxu0 0
        %882 = vmatmul.mubr.bf16.gmra.mrb[0].mxu0 %v361
        %v883 = vpop.f32.mrb[0].mxu0
        %v884 = vadd.f32 0.0, %v883
        %v885 = vpop.f32.mrb[0].mxu0
        %v886 = vpop.f32.mrb[0].mxu0
        %v887 = vadd.f32 0.0, %v886
        %v888 = vpop.f32.mrb[0].mxu0
        %889 = vmatprep.mubr.bf16.mxu0 0
        %890 = vmatmul.mubr.bf16.gmra.mrb[0].mxu0 %v362
        %v891 = vpop.f32.mrb[0].mxu0
        %v892 = vadd.f32 0.0, %v891
        %v893 = vpop.f32.mrb[0].mxu0
        %v894 = vpop.f32.mrb[0].mxu0
        %v895 = vadd.f32 0.0, %v894
        %v896 = vpop.f32.mrb[0].mxu0
        %897 = vmatprep.mubr.bf16.mxu0 0
        %898 = vmatmul.mubr.bf16.gmra.mrb[0].mxu0 %v363
        %v899 = vpop.f32.mrb[0].mxu0
        %v900 = vadd.f32 0.0, %v899
        %v901 = vpop.f32.mrb[0].mxu0
        %v902 = vpop.f32.mrb[0].mxu0
        %v903 = vadd.f32 0.0, %v902
        %v904 = vpop.f32.mrb[0].mxu0
        %905 = vmatprep.mubr.bf16.mxu0 0
        %906 = vmatmul.mubr.bf16.gmra.mrb[0].mxu0 %v364
        %v907 = vpop.f32.mrb[0].mxu0
        %v908 = vadd.f32 0.0, %v907
        %v909 = vpop.f32.mrb[0].mxu0
        %v910 = vpop.f32.mrb[0].mxu0
        %v911 = vadd.f32 0.0, %v910
        %v912 = vpop.f32.mrb[0].mxu0
        %913 = vmatprep.mubr.bf16.mxu0 0
        %914 = vmatmul.mubr.bf16.gmra.mrb[0].mxu0 %v365
        %v915 = vpop.f32.mrb[0].mxu0
        %v916 = vadd.f32 0.0, %v915
        %v917 = vpop.f32.mrb[0].mxu0
        %v918 = vpop.f32.mrb[0].mxu0
        %v919 = vadd.f32 0.0, %v918
        %v920 = vpop.f32.mrb[0].mxu0
        %921 = vmatprep.mubr.bf16.mxu0 0
        %922 = vmatmul.mubr.bf16.gmra.mrb[0].mxu0 %v366
        %v923 = vpop.f32.mrb[0].mxu0
        %v924 = vadd.f32 0.0, %v923
        %v925 = vpop.f32.mrb[0].mxu0
        %v926 = vpop.f32.mrb[0].mxu0
        %v927 = vadd.f32 0.0, %v926
        %v928 = vpop.f32.mrb[0].mxu0
        %929 = vmatprep.mubr.bf16.mxu0 0
        %930 = vmatmul.mubr.bf16.gmra.mrb[0].mxu0 %v367
        %v931 = vpop.f32.mrb[0].mxu0
        %v932 = vadd.f32 0.0, %v931
        %v933 = vpop.f32.mrb[0].mxu0
        %v934 = vpop.f32.mrb[0].mxu0
        %v935 = vadd.f32 0.0, %v934
        %v936 = vpop.f32.mrb[0].mxu0
        %937 = vmatprep.mubr.bf16.mxu0 0
        %938 = vmatmul.mubr.bf16.gmra.mrb[0].mxu0 %v368
        %v939 = vpop.f32.mrb[0].mxu0
        %v940 = vadd.f32 0.0, %v939
        %v941 = vpop.f32.mrb[0].mxu0
        %v942 = vpop.f32.mrb[0].mxu0
        %v943 = vadd.f32 0.0, %v942
        %v944 = vpop.f32.mrb[0].mxu0
        %945 = vmatprep.mubr.bf16.mxu0 0
        %946 = vmatmul.mubr.bf16.gmra.mrb[0].mxu0 %v369
        %v947 = vpop.f32.mrb[0].mxu0
        %v948 = vadd.f32 0.0, %v947
        %v949 = vpop.f32.mrb[0].mxu0
        %v950 = vpop.f32.mrb[0].mxu0
        %v951 = vadd.f32 0.0, %v950
        %v952 = vpop.f32.mrb[0].mxu0
        %953 = vmatprep.mubr.bf16.mxu0 0
        %954 = vmatmul.mubr.bf16.gmra.mrb[0].mxu0 %v370
        %v955 = vpop.f32.mrb[0].mxu0
        %v956 = vadd.f32 0.0, %v955
        %v957 = vpop.f32.mrb[0].mxu0
        %v958 = vpop.f32.mrb[0].mxu0
        %v959 = vadd.f32 0.0, %v958
        %v960 = vpop.f32.mrb[0].mxu0
        %961 = vmatprep.mubr.bf16.mxu0 0
        %962 = vmatmul.mubr.bf16.gmra.mrb[0].mxu0 %v371
        %v963 = vpop.f32.mrb[0].mxu0
        %v964 = vadd.f32 0.0, %v963
        %v965 = vpop.f32.mrb[0].mxu0
        %v966 = vpop.f32.mrb[0].mxu0
        %v967 = vadd.f32 0.0, %v966
        %v968 = vpop.f32.mrb[0].mxu0
        %969 = vmatprep.mubr.bf16.mxu0 0
        %970 = vmatmul.mubr.bf16.gmra.mrb[0].mxu0 %v372
        %v971 = vpop.f32.mrb[0].mxu0
        %v972 = vadd.f32 0.0, %v971
        %v973 = vpop.f32.mrb[0].mxu0
        %v974 = vpop.f32.mrb[0].mxu0
        %v975 = vadd.f32 0.0, %v974
        %v976 = vpop.f32.mrb[0].mxu0
        %977 = vmatprep.mubr.bf16.mxu0 0
        %978 = vmatmul.mubr.bf16.gmra.mrb[0].mxu0 %v373
        %v979 = vpop.f32.mrb[0].mxu0
        %v980 = vadd.f32 0.0, %v979
        %v981 = vpop.f32.mrb[0].mxu0
        %v982 = vpop.f32.mrb[0].mxu0
        %v983 = vadd.f32 0.0, %v982
        %v984 = vpop.f32.mrb[0].mxu0
        %985 = vmatprep.mubr.bf16.mxu0 0
        %986 = vmatmul.mubr.bf16.gmra.mrb[0].mxu0 %v374
        %v987 = vpop.f32.mrb[0].mxu0
        %v988 = vadd.f32 0.0, %v987
        %v989 = vpop.f32.mrb[0].mxu0
        %v990 = vpop.f32.mrb[0].mxu0
        %v991 = vadd.f32 0.0, %v990
        %v992 = vpop.f32.mrb[0].mxu0
        %993 = vmatprep.mubr.bf16.mxu0 0
        %994 = vmatmul.mubr.bf16.gmra.mrb[0].mxu0 %v375
        %v995 = vpop.f32.mrb[0].mxu0
        %v996 = vadd.f32 0.0, %v995
        %v997 = vpop.f32.mrb[0].mxu0
        %v998 = vpop.f32.mrb[0].mxu0
        %v999 = vadd.f32 0.0, %v998
        %v1000 = vpop.f32.mrb[0].mxu0
        %1001 = vdwg.mxu0
        %1002 = vst [vmem:[%s268] sm:$0xff] %v435
        %1003 = vst [vmem:[%s268 + $0x8] sm:$0xff] %v438
        %1004 = vst [vmem:[%s268 + $0x10] sm:$0xff] %v443
        %1005 = vst [vmem:[%s268 + $0x18] sm:$0xff] %v446
        %1006 = vst [vmem:[%s268 + $0x20] sm:$0xff] %v451
        %1007 = vst [vmem:[%s268 + $0x28] sm:$0xff] %v454
        %1008 = vst [vmem:[%s268 + $0x30] sm:$0xff] %v459
        %1009 = vst [vmem:[%s268 + $0x38] sm:$0xff] %v462
        %1010 = vst [vmem:[%s268 + $0x40] sm:$0xff] %v467
        %1011 = vst [vmem:[%s268 + $0x48] sm:$0xff] %v470
        %1012 = vst [vmem:[%s268 + $0x50] sm:$0xff] %v475
        %1013 = vst [vmem:[%s268 + $0x58] sm:$0xff] %v478
        %1014 = vst [vmem:[%s268 + $0x60] sm:$0xff] %v483
        %1015 = vst [vmem:[%s268 + $0x68] sm:$0xff] %v486
        %1016 = vst [vmem:[%s268 + $0x70] sm:$0xff] %v491
        %1017 = vst [vmem:[%s268 + $0x78] sm:$0xff] %v494
        %1018 = vst [vmem:[%s268 + $0x80] sm:$0xff] %v499
        %1019 = vst [vmem:[%s268 + $0x88] sm:$0xff] %v502
        %1020 = vst [vmem:[%s268 + $0x90] sm:$0xff] %v507
        %1021 = vst [vmem:[%s268 + $0x98] sm:$0xff] %v510
        %1022 = vst [vmem:[%s268 + $0xa0] sm:$0xff] %v515
        %1023 = vst [vmem:[%s268 + $0xa8] sm:$0xff] %v518
        %1024 = vst [vmem:[%s268 + $0xb0] sm:$0xff] %v523
        %1025 = vst [vmem:[%s268 + $0xb8] sm:$0xff] %v526
        %1026 = vst [vmem:[%s268 + $0xc0] sm:$0xff] %v531
        %1027 = vst [vmem:[%s268 + $0xc8] sm:$0xff] %v534
        %1028 = vst [vmem:[%s268 + $0xd0] sm:$0xff] %v539
        %1029 = vst [vmem:[%s268 + $0xd8] sm:$0xff] %v542
        %1030 = vst [vmem:[%s268 + $0xe0] sm:$0xff] %v547
        %1031 = vst [vmem:[%s268 + $0xe8] sm:$0xff] %v550
        %1032 = vst [vmem:[%s268 + $0xf0] sm:$0xff] %v555
        %1033 = vst [vmem:[%s268 + $0xf8] sm:$0xff] %v558
        %1034 = vst [vmem:[%s268 + $0x100] sm:$0xff] %v563
        %1035 = vst [vmem:[%s268 + $0x108] sm:$0xff] %v566
        %1036 = vst [vmem:[%s268 + $0x110] sm:$0xff] %v571
        %1037 = vst [vmem:[%s268 + $0x118] sm:$0xff] %v574
        %1038 = vst [vmem:[%s268 + $0x120] sm:$0xff] %v579
        %1039 = vst [vmem:[%s268 + $0x128] sm:$0xff] %v582
        %1040 = vst [vmem:[%s268 + $0x130] sm:$0xff] %v587
        %1041 = vst [vmem:[%s268 + $0x138] sm:$0xff] %v590
        %1042 = vst [vmem:[%s268 + $0x140] sm:$0xff] %v595
        %1043 = vst [vmem:[%s268 + $0x148] sm:$0xff] %v598
        %1044 = vst [vmem:[%s268 + $0x150] sm:$0xff] %v603
        %1045 = vst [vmem:[%s268 + $0x158] sm:$0xff] %v606
        %1046 = vst [vmem:[%s268 + $0x160] sm:$0xff] %v611
        %1047 = vst [vmem:[%s268 + $0x168] sm:$0xff] %v614
        %1048 = vst [vmem:[%s268 + $0x170] sm:$0xff] %v619
        %1049 = vst [vmem:[%s268 + $0x178] sm:$0xff] %v622
        %1050 = vst [vmem:[%s268 + $0x180] sm:$0xff] %v627
        %1051 = vst [vmem:[%s268 + $0x188] sm:$0xff] %v630
        %1052 = vst [vmem:[%s268 + $0x190] sm:$0xff] %v635
        %1053 = vst [vmem:[%s268 + $0x198] sm:$0xff] %v638
        %1054 = vst [vmem:[%s268 + $0x1a0] sm:$0xff] %v643
        %1055 = vst [vmem:[%s268 + $0x1a8] sm:$0xff] %v646
        %1056 = vst [vmem:[%s268 + $0x1b0] sm:$0xff] %v651
        %1057 = vst [vmem:[%s268 + $0x1b8] sm:$0xff] %v654
        %1058 = vst [vmem:[%s268 + $0x1c0] sm:$0xff] %v659
        %1059 = vst [vmem:[%s268 + $0x1c8] sm:$0xff] %v662
        %1060 = vst [vmem:[%s268 + $0x1d0] sm:$0xff] %v667
        %1061 = vst [vmem:[%s268 + $0x1d8] sm:$0xff] %v670
        %1062 = vst [vmem:[%s268 + $0x1e0] sm:$0xff] %v675
        %1063 = vst [vmem:[%s268 + $0x1e8] sm:$0xff] %v678
        %1064 = vst [vmem:[%s268 + $0x1f0] sm:$0xff] %v683
        %1065 = vst [vmem:[%s268 + $0x1f8] sm:$0xff] %v686
        %1066 = vst [vmem:[%s275] sm:$0xff] %v748
        %1067 = vst [vmem:[%s275 + $0x8] sm:$0xff] %v751
        %1068 = vst [vmem:[%s275 + $0x10] sm:$0xff] %v756
        %1069 = vst [vmem:[%s275 + $0x18] sm:$0xff] %v759
        %1070 = vst [vmem:[%s275 + $0x20] sm:$0xff] %v764
        %1071 = vst [vmem:[%s275 + $0x28] sm:$0xff] %v767
        %1072 = vst [vmem:[%s275 + $0x30] sm:$0xff] %v772
        %1073 = vst [vmem:[%s275 + $0x38] sm:$0xff] %v775
        %1074 = vst [vmem:[%s275 + $0x40] sm:$0xff] %v780
        %1075 = vst [vmem:[%s275 + $0x48] sm:$0xff] %v783
        %1076 = vst [vmem:[%s275 + $0x50] sm:$0xff] %v788
        %1077 = vst [vmem:[%s275 + $0x58] sm:$0xff] %v791
        %1078 = vst [vmem:[%s275 + $0x60] sm:$0xff] %v796
        %1079 = vst [vmem:[%s275 + $0x68] sm:$0xff] %v799
        %1080 = vst [vmem:[%s275 + $0x70] sm:$0xff] %v804
        %1081 = vst [vmem:[%s275 + $0x78] sm:$0xff] %v807
        %1082 = vst [vmem:[%s275 + $0x80] sm:$0xff] %v812
        %1083 = vst [vmem:[%s275 + $0x88] sm:$0xff] %v815
        %1084 = vst [vmem:[%s275 + $0x90] sm:$0xff] %v820
        %1085 = vst [vmem:[%s275 + $0x98] sm:$0xff] %v823
        %1086 = vst [vmem:[%s275 + $0xa0] sm:$0xff] %v828
        %1087 = vst [vmem:[%s275 + $0xa8] sm:$0xff] %v831
        %1088 = vst [vmem:[%s275 + $0xb0] sm:$0xff] %v836
        %1089 = vst [vmem:[%s275 + $0xb8] sm:$0xff] %v839
        %1090 = vst [vmem:[%s275 + $0xc0] sm:$0xff] %v844
        %1091 = vst [vmem:[%s275 + $0xc8] sm:$0xff] %v847
        %1092 = vst [vmem:[%s275 + $0xd0] sm:$0xff] %v852
        %1093 = vst [vmem:[%s275 + $0xd8] sm:$0xff] %v855
        %1094 = vst [vmem:[%s275 + $0xe0] sm:$0xff] %v860
        %1095 = vst [vmem:[%s275 + $0xe8] sm:$0xff] %v863
        %1096 = vst [vmem:[%s275 + $0xf0] sm:$0xff] %v868
        %1097 = vst [vmem:[%s275 + $0xf8] sm:$0xff] %v871
        %1098 = vst [vmem:[%s275 + $0x100] sm:$0xff] %v876
        %1099 = vst [vmem:[%s275 + $0x108] sm:$0xff] %v879
        %1100 = vst [vmem:[%s275 + $0x110] sm:$0xff] %v884
        %1101 = vst [vmem:[%s275 + $0x118] sm:$0xff] %v887
        %1102 = vst [vmem:[%s275 + $0x120] sm:$0xff] %v892
        %1103 = vst [vmem:[%s275 + $0x128] sm:$0xff] %v895
        %1104 = vst [vmem:[%s275 + $0x130] sm:$0xff] %v900
        %1105 = vst [vmem:[%s275 + $0x138] sm:$0xff] %v903
        %1106 = vst [vmem:[%s275 + $0x140] sm:$0xff] %v908
        %1107 = vst [vmem:[%s275 + $0x148] sm:$0xff] %v911
        %1108 = vst [vmem:[%s275 + $0x150] sm:$0xff] %v916
        %1109 = vst [vmem:[%s275 + $0x158] sm:$0xff] %v919
        %1110 = vst [vmem:[%s275 + $0x160] sm:$0xff] %v924
        %1111 = vst [vmem:[%s275 + $0x168] sm:$0xff] %v927
        %1112 = vst [vmem:[%s275 + $0x170] sm:$0xff] %v932
        %1113 = vst [vmem:[%s275 + $0x178] sm:$0xff] %v935
        %1114 = vst [vmem:[%s275 + $0x180] sm:$0xff] %v940
        %1115 = vst [vmem:[%s275 + $0x188] sm:$0xff] %v943
        %1116 = vst [vmem:[%s275 + $0x190] sm:$0xff] %v948
        %1117 = vst [vmem:[%s275 + $0x198] sm:$0xff] %v951
        %1118 = vst [vmem:[%s275 + $0x1a0] sm:$0xff] %v956
        %1119 = vst [vmem:[%s275 + $0x1a8] sm:$0xff] %v959
        %1120 = vst [vmem:[%s275 + $0x1b0] sm:$0xff] %v964
        %1121 = vst [vmem:[%s275 + $0x1b8] sm:$0xff] %v967
        %1122 = vst [vmem:[%s275 + $0x1c0] sm:$0xff] %v972
        %1123 = vst [vmem:[%s275 + $0x1c8] sm:$0xff] %v975
        %1124 = vst [vmem:[%s275 + $0x1d0] sm:$0xff] %v980
        %1125 = vst [vmem:[%s275 + $0x1d8] sm:$0xff] %v983
        %1126 = vst [vmem:[%s275 + $0x1e0] sm:$0xff] %v988
        %1127 = vst [vmem:[%s275 + $0x1e8] sm:$0xff] %v991
        %1128 = vst [vmem:[%s275 + $0x1f0] sm:$0xff] %v996
        %1129 = vst [vmem:[%s275 + $0x1f8] sm:$0xff] %v999
        %s1130 = sand.u32 %s118, 1
        %s1131 = scalar_lea.sflag [#allocation4], %s1130
        %s1132 = sand.u32 %s118, 1
        %s1133 = smul.addr %s1132, 512
        %s1134 = scalar_lea.vmem [#allocation8], %s1133
        %s1135 = sand.u32 %s146, 1
        %s1136 = scalar_lea.sflag [#allocation10], %s1135
        %s1137 = sand.u32 %s146, 1
        %s1138 = smul.addr %s1137, 512
        %s1139 = scalar_lea.vmem [#allocation9], %s1138
        // Predicated region
        $region45: #{tpu_custom_call.1} parent=31 // pred_check
          %p1140 = pneg %p128
        $region46: #{tpu_custom_call.1} parent=31 // pred_check_branch
          %1142 = sbr.rel (%p1140) target = $region48
        $region47: #{tpu_custom_call.1} parent=31 // pred_region
          %s1143 = smul.u32 64, %s31
          %s1145 = ssub.s32 8192, 8192
          %1146 = vsyncadd %s1131, %s1145
          %s1147 = smul.addr %s30, 64
          %s1148 = sadd.s32 %s1143, %s1147
          %s1149 = smul.addr %s1148, 128
          %s1150 = scalar_lea.hbm %s3, %s1149
          %s1151 = sshll.u32 %s1134, 4
          %s1152 = int_to_ptr.vmem [resolvable:$true] %s1151
          %1157 = dma.vmem_to_hbm [thread:$0]  %s1152, 8192, %s1150, %s1131, 128, 128, 8
        $region48: #{tpu_custom_call.1} parent=31 // pred_fallthru
          _
        // Predicated region
        $region49: #{tpu_custom_call.1} parent=31 // pred_check
          %p1158 = pneg %p156
        $region50: #{tpu_custom_call.1} parent=31 // pred_check_branch
          %1160 = sbr.rel (%p1158) target = $region52
        $region51: #{tpu_custom_call.1} parent=31 // pred_region
          %s1161 = smul.u32 64, %s31
          %s1163 = ssub.s32 8192, 8192
          %1164 = vsyncadd %s1136, %s1163
          %s1165 = smul.addr %s30, 64
          %s1166 = sadd.s32 %s1161, %s1165
          %s1167 = smul.addr %s1166, 128
          %s1168 = scalar_lea.hbm %s4, %s1167
          %s1169 = sshll.u32 %s1139, 4
          %s1170 = int_to_ptr.vmem [resolvable:$true] %s1169
          %1175 = dma.vmem_to_hbm [thread:$0]  %s1170, 8192, %s1168, %s1136, 128, 128, 8
        $region52: #{tpu_custom_call.1} parent=31 // pred_fallthru
          _
      $region32: #{tpu_custom_call.1} parent=5 // pred_fallthru
        _
      %p1176 = scmp.le.s32.totalorder 2, %s21
      // Predicated region
      $region53: #{tpu_custom_call.1} parent=5 // pred_check
        %p1177 = pneg %p1176
      $region54: #{tpu_custom_call.1} parent=5 // pred_check_branch
        %1179 = sbr.rel (%p1177) target = $region56
      $region55: #{tpu_custom_call.1} parent=5 // pred_region
        %s1180 = ssub.s32 %s21, 2
        // Predicated region
        $region57: #{tpu_custom_call.1} parent=55 // pred_check
          %p1181 = pneg %p134
        $region58: #{tpu_custom_call.1} parent=55 // pred_check_branch
          %1183 = sbr.rel (%p1181) target = $region60
        $region59: #{tpu_custom_call.1} parent=55 // pred_region
          %s1184 = sand.u32 %s119, 1
          %s1185 = scalar_lea.sflag [#allocation4], %s1184
          %s1186 = sand.u32 %s119, 1
          %s1187 = smul.addr %s1186, 512
          %s1188 = scalar_lea.vmem [#allocation8], %s1187
          %1189 = dma.done %s1185, 8192
        $region60: #{tpu_custom_call.1} parent=55 // pred_fallthru
          _
        // Predicated region
        $region61: #{tpu_custom_call.1} parent=55 // pred_check
          %p1190 = pneg %p162
        $region62: #{tpu_custom_call.1} parent=55 // pred_check_branch
          %1192 = sbr.rel (%p1190) target = $region64
        $region63: #{tpu_custom_call.1} parent=55 // pred_region
          %s1193 = sand.u32 %s147, 1
          %s1194 = scalar_lea.sflag [#allocation10], %s1193
          %s1195 = sand.u32 %s147, 1
          %s1196 = smul.addr %s1195, 512
          %s1197 = scalar_lea.vmem [#allocation9], %s1196
          %1198 = dma.done %s1194, 8192
        $region64: #{tpu_custom_call.1} parent=55 // pred_fallthru
          _
      $region56: #{tpu_custom_call.1} parent=5 // pred_fallthru
        _
    $region6: #{tpu_custom_call.1} parent=1 // loop_footer
      %s25 = sadd.s32 1, %s21
    $region7: #{tpu_custom_call.1} parent=1 // loop_footer_branch
      %20 = sbr.rel target = $region3
    $region8: #{tpu_custom_call.1} parent=1 // loop_exit
      _
    %1199 = vsyncpa [#allocation3], 1
    %s1200 = scalar_lea.sflag [#allocation3], 1
    %1201 = vsyncpa %s1200, 1
    %1202 = vsyncpa [#allocation6], 1
    %1203 = vsyncpa [#allocation4], 1
    %s1204 = scalar_lea.sflag [#allocation4], 1
    %1205 = vsyncpa %s1204, 1
    %1206 = vsyncpa [#allocation10], 1
    %s1207 = scalar_lea.sflag [#allocation10], 1
    %1208 = vsyncpa %s1207, 1

</llo_original>
